<compile_context>
chip_gen: v5e
topology: v5e:2x2
jax: 0.10.0
libtpu: 0.0.40
codegen_flags: <defaults>
</compile_context>

<pallas_src>
import jax
import jax.numpy as jnp
from jax.experimental import pallas as pl
from jax.experimental.pallas import tpu as pltpu

# ---------------- configuration ----------------
B = 2
H = W = 16
DIM = 64                        # input channels C
C4 = 4 * DIM                    # 256 merged channels
C2 = 2 * DIM                    # 128 output channels (lane-dense)
H2, W2 = H // 2, W // 2
L_OUT = H2 * W2                 # 64 merged tokens per image
TOK = B * L_OUT                 # 128 merged tokens total (one tile)
RB = B * H2                     # 16 merged rows total
EPS = 1e-5                      # nn.LayerNorm default


# ---------------- Pallas kernel: fused LayerNorm + split-K reduction ----------------
def _patch_merge_kernel(x_ref, wt_ref, wb_ref, bias_ref, o_ref):
    # x_ref:  (RB, 2, W2, 2C) f32   memory-natural merged tokens
    #         hs=0 half -> [x0 | x2] channels, hs=1 half -> [x1 | x3] channels
    # wt/wb:  (2C, 2C) bf16         LN-gamma-folded, row-permuted projection halves
    # bias:   (1, 2C)  f32          b @ w (LN beta folded through the projection)
    x = x_ref[...]
    xt = x[:, 0].reshape(TOK, C2)          # (128, 128) top half of each 2x2 patch
    xb = x[:, 1].reshape(TOK, C2)          # (128, 128) bottom half

    # One-pass LN statistics over the 4C merged channels (permutation-invariant).
    s1 = jnp.sum(xt, axis=-1, keepdims=True) + jnp.sum(xb, axis=-1, keepdims=True)
    s2 = (jnp.sum(xt * xt, axis=-1, keepdims=True)
          + jnp.sum(xb * xb, axis=-1, keepdims=True))
    mu = s1 * (1.0 / C4)
    # E[x^2] - mu^2: fine in f32 for LN-scale inputs; beware cancellation for
    # data with very large means.
    var = s2 * (1.0 / C4) - mu * mu
    inv = jax.lax.rsqrt(var + EPS)

    xnt = ((xt - mu) * inv).astype(jnp.bfloat16)
    xnb = ((xb - mu) * inv).astype(jnp.bfloat16)

    acc = jnp.dot(xnt, wt_ref[...], preferred_element_type=jnp.float32)
    acc = acc + jnp.dot(xnb, wb_ref[...], preferred_element_type=jnp.float32)
    # TODO(synk): emit bf16 here if the consuming layer is bf16 (halves store traffic).
    o_ref[...] = acc + bias_ref[...]


# ---------------- wrapper ----------------
def patch_merging_forward(x, w_top, w_bot, bias):
    """x: (B, H*W, C) f32 -> (B, H*W/4, 2*C) f32.  Matches PatchMerging.forward."""
    b_, l, c = x.shape
    assert l == H * W and c == DIM

    # Pure reshape (no transpose, no HBM round trip):
    # (B, H*W, C) -> (B*H/2, 2, W/2, 2C); last dim order per merged token is
    # [w-even C | w-odd C], i.e. top half = [x0|x2], bottom half = [x1|x3].
    x4 = x.reshape(b_ * H2, 2, W2, 2 * c)

    # Single grid step: the whole 128-token slab is one tile (fixed-overhead /
    # latency bound at this size; multi-step only adds per-step cost on 1-TC
    # chips).  TODO(synk): on v7x optionally benchmark a 2-step "parallel" grid
    # (one 64-token tile per TensorCore); expected delta is a few hundred ns.
    y = pl.pallas_call(
        _patch_merge_kernel,
        out_shape=jax.ShapeDtypeStruct((TOK, C2), jnp.float32),
        grid=(1,),
        in_specs=[
            pl.BlockSpec((RB, 2, W2, C2), lambda i: (0, 0, 0, 0)),
            pl.BlockSpec((C2, C2), lambda i: (0, 0)),
            pl.BlockSpec((C2, C2), lambda i: (0, 0)),
            pl.BlockSpec((1, C2), lambda i: (0, 0)),
        ],
        out_specs=pl.BlockSpec((TOK, C2), lambda i: (0, 0)),
        # At real HTSAT dims (dim up to 768 -> 4C=3072) raise vmem_limit_bytes
        # via pltpu.CompilerParams for v7x's smaller VMEM; unnecessary here.
    )(x4, w_top, w_bot, bias)
    return y.reshape(b_, L_OUT, C2)


# ---------------- parameter preparation (done once, outside the kernel) ----------------
def prepare_params(g, b, w):
    """Fold LN affine into the projection and permute rows to memory-natural order.

    g, b: (1, 4C) LayerNorm weight / bias (PyTorch cat order [x0|x1|x2|x3]).
    w:    (4C, 2C) reduction weight (nn.Linear weight transposed).
    """
    wf = g.reshape(-1, 1) * w                       # gamma folded per input row
    bias = (b.reshape(1, -1) @ w).astype(jnp.float32)   # beta folded -> output bias
    # Memory-natural channel order: top = [x0 | x2], bottom = [x1 | x3].
    w_top = jnp.concatenate([wf[0 * DIM:1 * DIM], wf[2 * DIM:3 * DIM]], axis=0)
    w_bot = jnp.concatenate([wf[1 * DIM:2 * DIM], wf[3 * DIM:4 * DIM]], axis=0)
    return w_top.astype(jnp.bfloat16), w_bot.astype(jnp.bfloat16), bias


# ---------------- pure-JAX reference (mirrors the PyTorch forward, f32) ----------------
def ref_forward(x, g, b, w):
    b_, l, c = x.shape
    xr = x.reshape(b_, H, W, c)
    x0 = xr[:, 0::2, 0::2, :]
    x1 = xr[:, 1::2, 0::2, :]
    x2 = xr[:, 0::2, 1::2, :]
    x3 = xr[:, 1::2, 1::2, :]
    xc = jnp.concatenate([x0, x1, x2, x3], axis=-1).reshape(b_, -1, 4 * c)
    mu = jnp.mean(xc, axis=-1, keepdims=True)
    var = jnp.mean(jnp.square(xc - mu), axis=-1, keepdims=True)
    xn = (xc - mu) * jax.lax.rsqrt(var + EPS) * g[0] + b[0]
    return xn @ w


# ---------------- deterministic parameters ----------------
def build_params(key):
    k1, k2, k3 = jax.random.split(key, 3)
    g = 1.0 + 0.02 * jax.random.normal(k1, (1, C4), jnp.float32)    # LN weight
    bta = 0.02 * jax.random.normal(k2, (1, C4), jnp.float32)        # LN bias
    # nn.Linear(4C, 2C, bias=False) weight is (2C, 4C); stored transposed here.
    w = 0.02 * jax.random.normal(k3, (C4, C2), jnp.float32)
    return g, bta, w


# ---------------- main ----------------
if __name__ == "__main__":
    key = jax.random.PRNGKey(0)
    k_x, k_p = jax.random.split(key, 2)

    x = jax.random.normal(k_x, (B, H * W, DIM), jnp.float32)        # (2, 256, 64)
    g, bta, w = build_params(k_p)
    w_top, w_bot, bias = prepare_params(g, bta, w)                  # folded, bf16

    fwd = jax.jit(lambda xx: patch_merging_forward(xx, w_top, w_bot, bias))
    y = fwd(x)
    jax.block_until_ready(y)

    y_ref = ref_forward(x, g, bta, w)
    assert y.shape == (B, L_OUT, C2), y.shape
    max_err = float(jnp.max(jnp.abs(y - y_ref)))
    # bf16 MXU operands with f32 accumulation -> loosened tolerance.
    assert jnp.allclose(y, y_ref, atol=2.5e-2, rtol=2e-2), max_err

    print("KERNEL_OK")
</pallas_src>

<mosaic_0001>
module attributes {stable_mosaic.version = 11 : i64} {
  func.func @_patch_merge_kernel(%arg0: i32, %arg1: memref<16x2x8x128xf32, #tpu.memory_space<vmem>>, %arg2: memref<128x128xbf16, #tpu.memory_space<vmem>>, %arg3: memref<128x128xbf16, #tpu.memory_space<vmem>>, %arg4: memref<1x128xf32, #tpu.memory_space<vmem>>, %arg5: memref<128x128xf32, #tpu.memory_space<vmem>>) attributes {dimension_semantics = [#tpu.dimension_semantics<arbitrary>], iteration_bounds = array<i64: 1>, scalar_prefetch = 0 : i64, scratch_operands = 0 : i64, tpu.core_type = #tpu.core_type<tc>, window_params = [{pipeline_mode = #tpu.pipeline_mode<synchronous>, transform_indices = @transform_0, window_bounds = array<i64: 16, 2, 8, 128>}, {pipeline_mode = #tpu.pipeline_mode<synchronous>, transform_indices = @transform_1, window_bounds = array<i64: 128, 128>}, {pipeline_mode = #tpu.pipeline_mode<synchronous>, transform_indices = @transform_2, window_bounds = array<i64: 128, 128>}, {pipeline_mode = #tpu.pipeline_mode<synchronous>, transform_indices = @transform_3, window_bounds = array<i64: 1, 128>}, {pipeline_mode = #tpu.pipeline_mode<synchronous>, transform_indices = @transform_4, window_bounds = array<i64: 128, 128>}]} {
    %c0 = arith.constant 0 : index
    %c0_0 = arith.constant 0 : index
    %c0_1 = arith.constant 0 : index
    %c0_2 = arith.constant 0 : index
    %0 = vector.load %arg1[%c0, %c0_0, %c0_1, %c0_2] : memref<16x2x8x128xf32, #tpu.memory_space<vmem>>, vector<16x2x8x128xf32>
    %1 = vector.extract_strided_slice %0 {offsets = [0, 0, 0, 0], sizes = [16, 1, 8, 128], strides = [1, 1, 1, 1]} : vector<16x2x8x128xf32> to vector<16x1x8x128xf32>
    %2 = vector.shape_cast %1 : vector<16x1x8x128xf32> to vector<16x8x128xf32>
    %3 = vector.shape_cast %2 : vector<16x8x128xf32> to vector<128x128xf32>
    %4 = vector.extract_strided_slice %0 {offsets = [0, 1, 0, 0], sizes = [16, 1, 8, 128], strides = [1, 1, 1, 1]} : vector<16x2x8x128xf32> to vector<16x1x8x128xf32>
    %5 = vector.shape_cast %4 : vector<16x1x8x128xf32> to vector<16x8x128xf32>
    %6 = vector.shape_cast %5 : vector<16x8x128xf32> to vector<128x128xf32>
    %cst = arith.constant dense<0.000000e+00> : vector<128xf32>
    %7 = vector.multi_reduction <add>, %3, %cst [1] : vector<128x128xf32> to vector<128xf32>
    %8 = vector.shape_cast %7 : vector<128xf32> to vector<128x1xf32>
    %cst_3 = arith.constant dense<0.000000e+00> : vector<128xf32>
    %9 = vector.multi_reduction <add>, %6, %cst_3 [1] : vector<128x128xf32> to vector<128xf32>
    %10 = vector.shape_cast %9 : vector<128xf32> to vector<128x1xf32>
    %11 = arith.addf %8, %10 : vector<128x1xf32>
    %12 = arith.mulf %3, %3 : vector<128x128xf32>
    %cst_4 = arith.constant dense<0.000000e+00> : vector<128xf32>
    %13 = vector.multi_reduction <add>, %12, %cst_4 [1] : vector<128x128xf32> to vector<128xf32>
    %14 = vector.shape_cast %13 : vector<128xf32> to vector<128x1xf32>
    %15 = arith.mulf %6, %6 : vector<128x128xf32>
    %cst_5 = arith.constant dense<0.000000e+00> : vector<128xf32>
    %16 = vector.multi_reduction <add>, %15, %cst_5 [1] : vector<128x128xf32> to vector<128xf32>
    %17 = vector.shape_cast %16 : vector<128xf32> to vector<128x1xf32>
    %18 = arith.addf %14, %17 : vector<128x1xf32>
    %cst_6 = arith.constant 3.906250e-03 : f32
    %19 = vector.broadcast %cst_6 : f32 to vector<128x1xf32>
    %20 = arith.mulf %11, %19 : vector<128x1xf32>
    %cst_7 = arith.constant 3.906250e-03 : f32
    %21 = vector.broadcast %cst_7 : f32 to vector<128x1xf32>
    %22 = arith.mulf %18, %21 : vector<128x1xf32>
    %23 = arith.mulf %20, %20 : vector<128x1xf32>
    %24 = arith.subf %22, %23 : vector<128x1xf32>
    %cst_8 = arith.constant 9.99999974E-6 : f32
    %25 = vector.broadcast %cst_8 : f32 to vector<128x1xf32>
    %26 = arith.addf %24, %25 : vector<128x1xf32>
    %27 = math.rsqrt %26 : vector<128x1xf32>
    %28 = vector.broadcast %20 : vector<128x1xf32> to vector<128x128xf32>
    %29 = arith.subf %3, %28 : vector<128x128xf32>
    %30 = vector.broadcast %27 : vector<128x1xf32> to vector<128x128xf32>
    %31 = arith.mulf %29, %30 : vector<128x128xf32>
    %32 = arith.truncf %31 : vector<128x128xf32> to vector<128x128xbf16>
    %33 = vector.broadcast %20 : vector<128x1xf32> to vector<128x128xf32>
    %34 = arith.subf %6, %33 : vector<128x128xf32>
    %35 = vector.broadcast %27 : vector<128x1xf32> to vector<128x128xf32>
    %36 = arith.mulf %34, %35 : vector<128x128xf32>
    %37 = arith.truncf %36 : vector<128x128xf32> to vector<128x128xbf16>
    %c0_9 = arith.constant 0 : index
    %c0_10 = arith.constant 0 : index
    %38 = vector.load %arg2[%c0_9, %c0_10] : memref<128x128xbf16, #tpu.memory_space<vmem>>, vector<128x128xbf16>
    %cst_11 = arith.constant dense<0.000000e+00> : vector<128x128xf32>
    %39 = tpu.matmul %32, %38, %cst_11 {dimension_numbers = #tpu.dot_dimension_numbers<[1], [0], [0], [1], [0, 0, 1, 1], [], []>} : vector<128x128xbf16>, vector<128x128xbf16>, vector<128x128xf32> -> vector<128x128xf32>
    %c0_12 = arith.constant 0 : index
    %c0_13 = arith.constant 0 : index
    %40 = vector.load %arg3[%c0_12, %c0_13] : memref<128x128xbf16, #tpu.memory_space<vmem>>, vector<128x128xbf16>
    %cst_14 = arith.constant dense<0.000000e+00> : vector<128x128xf32>
    %41 = tpu.matmul %37, %40, %cst_14 {dimension_numbers = #tpu.dot_dimension_numbers<[1], [0], [0], [1], [0, 0, 1, 1], [], []>} : vector<128x128xbf16>, vector<128x128xbf16>, vector<128x128xf32> -> vector<128x128xf32>
    %42 = arith.addf %39, %41 : vector<128x128xf32>
    %c0_15 = arith.constant 0 : index
    %c0_16 = arith.constant 0 : index
    %43 = vector.load %arg4[%c0_15, %c0_16] : memref<1x128xf32, #tpu.memory_space<vmem>>, vector<1x128xf32>
    %44 = vector.broadcast %43 : vector<1x128xf32> to vector<128x128xf32>
    %45 = arith.addf %42, %44 : vector<128x128xf32>
    %c0_17 = arith.constant 0 : index
    %c0_18 = arith.constant 0 : index
    %46 = vector.load %arg5[%c0_17, %c0_18] : memref<128x128xf32, #tpu.memory_space<vmem>>, vector<128x128xf32>
    tpu.vector_store %arg5[%c0_17, %c0_18], %45 {strides = array<i32>} : memref<128x128xf32, #tpu.memory_space<vmem>>, vector<128x128xf32>,
    return
  }
  func.func @transform_0(%arg0: i32) -> (i32, i32, i32, i32) {
    %c0_i32 = arith.constant 0 : i32
    %c0_i32_0 = arith.constant 0 : i32
    %c0_i32_1 = arith.constant 0 : i32
    %c0_i32_2 = arith.constant 0 : i32
    %c0_i32_3 = arith.constant 0 : i32
    return %c0_i32, %c0_i32_0, %c0_i32_1, %c0_i32_2 : i32, i32, i32, i32
  }
  func.func @transform_1(%arg0: i32) -> (i32, i32) {
    %c0_i32 = arith.constant 0 : i32
    %c0_i32_0 = arith.constant 0 : i32
    %c0_i32_1 = arith.constant 0 : i32
    return %c0_i32, %c0_i32_0 : i32, i32
  }
  func.func @transform_2(%arg0: i32) -> (i32, i32) {
    %c0_i32 = arith.constant 0 : i32
    %c0_i32_0 = arith.constant 0 : i32
    %c0_i32_1 = arith.constant 0 : i32
    return %c0_i32, %c0_i32_0 : i32, i32
  }
  func.func @transform_3(%arg0: i32) -> (i32, i32) {
    %c0_i32 = arith.constant 0 : i32
    %c0_i32_0 = arith.constant 0 : i32
    %c0_i32_1 = arith.constant 0 : i32
    return %c0_i32, %c0_i32_0 : i32, i32
  }
  func.func @transform_4(%arg0: i32) -> (i32, i32) {
    %c0_i32 = arith.constant 0 : i32
    %c0_i32_0 = arith.constant 0 : i32
    %c0_i32_1 = arith.constant 0 : i32
    return %c0_i32, %c0_i32_0 : i32, i32
  }
}

</mosaic_0001>

<llo_original>
// kernel: _lambda_.1
$region0: #{_lambda_.1}
  #allocation0 [shape = 'u32[]', space=smem, size = 0x4, offset = 0x4, fixed_abs, tag = 'smem constant byte address 0x4 - core index']
  #allocation1 [shape = 'u32[72,128]{1,0:T(1,128)}', space=vmem, size = 0x9000, scoped, tag = 'internal scratch']
  %s0 = inlined_call_operand.vmem [shape: f32[16,2,8,128], index: 0, kind: input, shape index: {}]
  %s1 = inlined_call_operand.vmem [shape: bf16[128,128], index: 1, kind: input, shape index: {}]
  %s2 = inlined_call_operand.vmem [shape: bf16[128,128], index: 2, kind: input, shape index: {}]
  %s3 = inlined_call_operand.vmem [shape: f32[1,128], index: 3, kind: input, shape index: {}]
  %s4 = inlined_call_operand.hbm [shape: f32[128,128], index: 4, kind: output, shape index: {}]
  %s5 = sld [smem:[#allocation0]]
  $region26: #{_lambda_.1} parent=0
    _
  %s7 = ssub.s32 1, %s5
  %s8 = scalar_select 0, %s7, %s5
  $region1: #{_lambda_.1} parent=0
    #allocation2 [shape = 'u8[65536]{0}', space=vmem, size = 0x10000, scoped, tag = 'output window, operand 0, single buffered']
    #allocation3 [shape = 's32[1]{0}', space=sflag, size = 0x4, scoped, tag = 'scoped memory for _lambda_.1']
    %9 = vsyncpa [#allocation3], 0
    // Predicated region
    $region2: #{_lambda_.1} parent=1 // pred_check
      _
    $region3: #{_lambda_.1} parent=1 // pred_check_branch
      %11 = sbr.rel (0) target = $region5
    $region4: #{_lambda_.1} parent=1 // pred_region
      _
    $region5: #{_lambda_.1} parent=1 // pred_fallthru
      _
    // Predicated region
    $region6: #{_lambda_.1} parent=1 // pred_check
      _
    $region7: #{_lambda_.1} parent=1 // pred_check_branch
      %13 = sbr.rel (0) target = $region9
    $region8: #{_lambda_.1} parent=1 // pred_region
      _
    $region9: #{_lambda_.1} parent=1 // pred_fallthru
      _
    // Predicated region
    $region10: #{_lambda_.1} parent=1 // pred_check
      _
    $region11: #{_lambda_.1} parent=1 // pred_check_branch
      %15 = sbr.rel (0) target = $region13
    $region12: #{_lambda_.1} parent=1 // pred_region
      _
    $region13: #{_lambda_.1} parent=1 // pred_fallthru
      _
    // Predicated region
    $region14: #{_lambda_.1} parent=1 // pred_check
      _
    $region15: #{_lambda_.1} parent=1 // pred_check_branch
      %17 = sbr.rel (0) target = $region17
    $region16: #{_lambda_.1} parent=1 // pred_region
      _
    $region17: #{_lambda_.1} parent=1 // pred_fallthru
      _
    %v18 = vld [vmem:[%s0] sm:$0xff]
    %v19 = vld [vmem:[%s0 + $0x8] sm:$0xff]
    %v20 = vld [vmem:[%s0 + $0x10] sm:$0xff]
    %v21 = vld [vmem:[%s0 + $0x18] sm:$0xff]
    %v22 = vld [vmem:[%s0 + $0x20] sm:$0xff]
    %v23 = vld [vmem:[%s0 + $0x28] sm:$0xff]
    %v24 = vld [vmem:[%s0 + $0x30] sm:$0xff]
    %v25 = vld [vmem:[%s0 + $0x38] sm:$0xff]
    %v26 = vld [vmem:[%s0 + $0x40] sm:$0xff]
    %v27 = vld [vmem:[%s0 + $0x48] sm:$0xff]
    %v28 = vld [vmem:[%s0 + $0x50] sm:$0xff]
    %v29 = vld [vmem:[%s0 + $0x58] sm:$0xff]
    %v30 = vld [vmem:[%s0 + $0x60] sm:$0xff]
    %v31 = vld [vmem:[%s0 + $0x68] sm:$0xff]
    %v32 = vld [vmem:[%s0 + $0x70] sm:$0xff]
    %v33 = vld [vmem:[%s0 + $0x78] sm:$0xff]
    %v34 = vld [vmem:[%s0 + $0x80] sm:$0xff]
    %v35 = vld [vmem:[%s0 + $0x88] sm:$0xff]
    %v36 = vld [vmem:[%s0 + $0x90] sm:$0xff]
    %v37 = vld [vmem:[%s0 + $0x98] sm:$0xff]
    %v38 = vld [vmem:[%s0 + $0xa0] sm:$0xff]
    %v39 = vld [vmem:[%s0 + $0xa8] sm:$0xff]
    %v40 = vld [vmem:[%s0 + $0xb0] sm:$0xff]
    %v41 = vld [vmem:[%s0 + $0xb8] sm:$0xff]
    %v42 = vld [vmem:[%s0 + $0xc0] sm:$0xff]
    %v43 = vld [vmem:[%s0 + $0xc8] sm:$0xff]
    %v44 = vld [vmem:[%s0 + $0xd0] sm:$0xff]
    %v45 = vld [vmem:[%s0 + $0xd8] sm:$0xff]
    %v46 = vld [vmem:[%s0 + $0xe0] sm:$0xff]
    %v47 = vld [vmem:[%s0 + $0xe8] sm:$0xff]
    %v48 = vld [vmem:[%s0 + $0xf0] sm:$0xff]
    %v49 = vld [vmem:[%s0 + $0xf8] sm:$0xff]
    %50 = vadd.xlane.f32.xlu0 %v18
    %v51 = vpop.xlane.xlu0 %50
    %52 = vadd.xlane.f32.xlu0 %v20
    %v53 = vpop.xlane.xlu0 %52
    %54 = vadd.xlane.f32.xlu0 %v22
    %v55 = vpop.xlane.xlu0 %54
    %56 = vadd.xlane.f32.xlu0 %v24
    %v57 = vpop.xlane.xlu0 %56
    %58 = vadd.xlane.f32.xlu0 %v26
    %v59 = vpop.xlane.xlu0 %58
    %60 = vadd.xlane.f32.xlu0 %v28
    %v61 = vpop.xlane.xlu0 %60
    %62 = vadd.xlane.f32.xlu0 %v30
    %v63 = vpop.xlane.xlu0 %62
    %64 = vadd.xlane.f32.xlu0 %v32
    %v65 = vpop.xlane.xlu0 %64
    %66 = vadd.xlane.f32.xlu0 %v34
    %v67 = vpop.xlane.xlu0 %66
    %68 = vadd.xlane.f32.xlu0 %v36
    %v69 = vpop.xlane.xlu0 %68
    %70 = vadd.xlane.f32.xlu0 %v38
    %v71 = vpop.xlane.xlu0 %70
    %72 = vadd.xlane.f32.xlu0 %v40
    %v73 = vpop.xlane.xlu0 %72
    %74 = vadd.xlane.f32.xlu0 %v42
    %v75 = vpop.xlane.xlu0 %74
    %76 = vadd.xlane.f32.xlu0 %v44
    %v77 = vpop.xlane.xlu0 %76
    %78 = vadd.xlane.f32.xlu0 %v46
    %v79 = vpop.xlane.xlu0 %78
    %80 = vadd.xlane.f32.xlu0 %v48
    %v81 = vpop.xlane.xlu0 %80
    %82 = vadd.xlane.f32.xlu0 %v19
    %v83 = vpop.xlane.xlu0 %82
    %84 = vadd.xlane.f32.xlu0 %v21
    %v85 = vpop.xlane.xlu0 %84
    %86 = vadd.xlane.f32.xlu0 %v23
    %v87 = vpop.xlane.xlu0 %86
    %88 = vadd.xlane.f32.xlu0 %v25
    %v89 = vpop.xlane.xlu0 %88
    %90 = vadd.xlane.f32.xlu0 %v27
    %v91 = vpop.xlane.xlu0 %90
    %92 = vadd.xlane.f32.xlu0 %v29
    %v93 = vpop.xlane.xlu0 %92
    %94 = vadd.xlane.f32.xlu0 %v31
    %v95 = vpop.xlane.xlu0 %94
    %96 = vadd.xlane.f32.xlu0 %v33
    %v97 = vpop.xlane.xlu0 %96
    %98 = vadd.xlane.f32.xlu0 %v35
    %v99 = vpop.xlane.xlu0 %98
    %100 = vadd.xlane.f32.xlu0 %v37
    %v101 = vpop.xlane.xlu0 %100
    %102 = vadd.xlane.f32.xlu0 %v39
    %v103 = vpop.xlane.xlu0 %102
    %104 = vadd.xlane.f32.xlu0 %v41
    %v105 = vpop.xlane.xlu0 %104
    %106 = vadd.xlane.f32.xlu0 %v43
    %v107 = vpop.xlane.xlu0 %106
    %108 = vadd.xlane.f32.xlu0 %v45
    %v109 = vpop.xlane.xlu0 %108
    %110 = vadd.xlane.f32.xlu0 %v47
    %v111 = vpop.xlane.xlu0 %110
    %112 = vadd.xlane.f32.xlu0 %v49
    %v113 = vpop.xlane.xlu0 %112
    %v114 = vadd.f32 %v51, %v83
    %v115 = vadd.f32 %v53, %v85
    %v116 = vadd.f32 %v55, %v87
    %v117 = vadd.f32 %v57, %v89
    %v118 = vadd.f32 %v59, %v91
    %v119 = vadd.f32 %v61, %v93
    %v120 = vadd.f32 %v63, %v95
    %v121 = vadd.f32 %v65, %v97
    %v122 = vadd.f32 %v67, %v99
    %v123 = vadd.f32 %v69, %v101
    %v124 = vadd.f32 %v71, %v103
    %v125 = vadd.f32 %v73, %v105
    %v126 = vadd.f32 %v75, %v107
    %v127 = vadd.f32 %v77, %v109
    %v128 = vadd.f32 %v79, %v111
    %v129 = vadd.f32 %v81, %v113
    %v130 = vmul.f32 %v18, %v18
    %v131 = vmul.f32 %v20, %v20
    %v132 = vmul.f32 %v22, %v22
    %v133 = vmul.f32 %v24, %v24
    %v134 = vmul.f32 %v26, %v26
    %v135 = vmul.f32 %v28, %v28
    %v136 = vmul.f32 %v30, %v30
    %v137 = vmul.f32 %v32, %v32
    %v138 = vmul.f32 %v34, %v34
    %v139 = vmul.f32 %v36, %v36
    %v140 = vmul.f32 %v38, %v38
    %v141 = vmul.f32 %v40, %v40
    %v142 = vmul.f32 %v42, %v42
    %v143 = vmul.f32 %v44, %v44
    %v144 = vmul.f32 %v46, %v46
    %v145 = vmul.f32 %v48, %v48
    %146 = vadd.xlane.f32.xlu0 %v130
    %v147 = vpop.xlane.xlu0 %146
    %148 = vadd.xlane.f32.xlu0 %v131
    %v149 = vpop.xlane.xlu0 %148
    %150 = vadd.xlane.f32.xlu0 %v132
    %v151 = vpop.xlane.xlu0 %150
    %152 = vadd.xlane.f32.xlu0 %v133
    %v153 = vpop.xlane.xlu0 %152
    %154 = vadd.xlane.f32.xlu0 %v134
    %v155 = vpop.xlane.xlu0 %154
    %156 = vadd.xlane.f32.xlu0 %v135
    %v157 = vpop.xlane.xlu0 %156
    %158 = vadd.xlane.f32.xlu0 %v136
    %v159 = vpop.xlane.xlu0 %158
    %160 = vadd.xlane.f32.xlu0 %v137
    %v161 = vpop.xlane.xlu0 %160
    %162 = vadd.xlane.f32.xlu0 %v138
    %v163 = vpop.xlane.xlu0 %162
    %164 = vadd.xlane.f32.xlu0 %v139
    %v165 = vpop.xlane.xlu0 %164
    %166 = vadd.xlane.f32.xlu0 %v140
    %v167 = vpop.xlane.xlu0 %166
    %168 = vadd.xlane.f32.xlu0 %v141
    %v169 = vpop.xlane.xlu0 %168
    %170 = vadd.xlane.f32.xlu0 %v142
    %v171 = vpop.xlane.xlu0 %170
    %172 = vadd.xlane.f32.xlu0 %v143
    %v173 = vpop.xlane.xlu0 %172
    %174 = vadd.xlane.f32.xlu0 %v144
    %v175 = vpop.xlane.xlu0 %174
    %176 = vadd.xlane.f32.xlu0 %v145
    %v177 = vpop.xlane.xlu0 %176
    %v178 = vmul.f32 %v19, %v19
    %v179 = vmul.f32 %v21, %v21
    %v180 = vmul.f32 %v23, %v23
    %v181 = vmul.f32 %v25, %v25
    %v182 = vmul.f32 %v27, %v27
    %v183 = vmul.f32 %v29, %v29
    %v184 = vmul.f32 %v31, %v31
    %v185 = vmul.f32 %v33, %v33
    %v186 = vmul.f32 %v35, %v35
    %v187 = vmul.f32 %v37, %v37
    %v188 = vmul.f32 %v39, %v39
    %v189 = vmul.f32 %v41, %v41
    %v190 = vmul.f32 %v43, %v43
    %v191 = vmul.f32 %v45, %v45
    %v192 = vmul.f32 %v47, %v47
    %v193 = vmul.f32 %v49, %v49
    %194 = vadd.xlane.f32.xlu0 %v178
    %v195 = vpop.xlane.xlu0 %194
    %196 = vadd.xlane.f32.xlu0 %v179
    %v197 = vpop.xlane.xlu0 %196
    %198 = vadd.xlane.f32.xlu0 %v180
    %v199 = vpop.xlane.xlu0 %198
    %200 = vadd.xlane.f32.xlu0 %v181
    %v201 = vpop.xlane.xlu0 %200
    %202 = vadd.xlane.f32.xlu0 %v182
    %v203 = vpop.xlane.xlu0 %202
    %204 = vadd.xlane.f32.xlu0 %v183
    %v205 = vpop.xlane.xlu0 %204
    %206 = vadd.xlane.f32.xlu0 %v184
    %v207 = vpop.xlane.xlu0 %206
    %208 = vadd.xlane.f32.xlu0 %v185
    %v209 = vpop.xlane.xlu0 %208
    %210 = vadd.xlane.f32.xlu0 %v186
    %v211 = vpop.xlane.xlu0 %210
    %212 = vadd.xlane.f32.xlu0 %v187
    %v213 = vpop.xlane.xlu0 %212
    %214 = vadd.xlane.f32.xlu0 %v188
    %v215 = vpop.xlane.xlu0 %214
    %216 = vadd.xlane.f32.xlu0 %v189
    %v217 = vpop.xlane.xlu0 %216
    %218 = vadd.xlane.f32.xlu0 %v190
    %v219 = vpop.xlane.xlu0 %218
    %220 = vadd.xlane.f32.xlu0 %v191
    %v221 = vpop.xlane.xlu0 %220
    %222 = vadd.xlane.f32.xlu0 %v192
    %v223 = vpop.xlane.xlu0 %222
    %224 = vadd.xlane.f32.xlu0 %v193
    %v225 = vpop.xlane.xlu0 %224
    %v226 = vadd.f32 %v147, %v195
    %v227 = vadd.f32 %v149, %v197
    %v228 = vadd.f32 %v151, %v199
    %v229 = vadd.f32 %v153, %v201
    %v230 = vadd.f32 %v155, %v203
    %v231 = vadd.f32 %v157, %v205
    %v232 = vadd.f32 %v159, %v207
    %v233 = vadd.f32 %v161, %v209
    %v234 = vadd.f32 %v163, %v211
    %v235 = vadd.f32 %v165, %v213
    %v236 = vadd.f32 %v167, %v215
    %v237 = vadd.f32 %v169, %v217
    %v238 = vadd.f32 %v171, %v219
    %v239 = vadd.f32 %v173, %v221
    %v240 = vadd.f32 %v175, %v223
    %v241 = vadd.f32 %v177, %v225
    %v242 = vmul.f32 %v114, 0.00390625
    %v243 = vmul.f32 %v115, 0.00390625
    %v244 = vmul.f32 %v116, 0.00390625
    %v245 = vmul.f32 %v117, 0.00390625
    %v246 = vmul.f32 %v118, 0.00390625
    %v247 = vmul.f32 %v119, 0.00390625
    %v248 = vmul.f32 %v120, 0.00390625
    %v249 = vmul.f32 %v121, 0.00390625
    %v250 = vmul.f32 %v122, 0.00390625
    %v251 = vmul.f32 %v123, 0.00390625
    %v252 = vmul.f32 %v124, 0.00390625
    %v253 = vmul.f32 %v125, 0.00390625
    %v254 = vmul.f32 %v126, 0.00390625
    %v255 = vmul.f32 %v127, 0.00390625
    %v256 = vmul.f32 %v128, 0.00390625
    %v257 = vmul.f32 %v129, 0.00390625
    %v258 = vmul.f32 %v226, 0.00390625
    %v259 = vmul.f32 %v227, 0.00390625
    %v260 = vmul.f32 %v228, 0.00390625
    %v261 = vmul.f32 %v229, 0.00390625
    %v262 = vmul.f32 %v230, 0.00390625
    %v263 = vmul.f32 %v231, 0.00390625
    %v264 = vmul.f32 %v232, 0.00390625
    %v265 = vmul.f32 %v233, 0.00390625
    %v266 = vmul.f32 %v234, 0.00390625
    %v267 = vmul.f32 %v235, 0.00390625
    %v268 = vmul.f32 %v236, 0.00390625
    %v269 = vmul.f32 %v237, 0.00390625
    %v270 = vmul.f32 %v238, 0.00390625
    %v271 = vmul.f32 %v239, 0.00390625
    %v272 = vmul.f32 %v240, 0.00390625
    %v273 = vmul.f32 %v241, 0.00390625
    %v274 = vmul.f32 %v242, %v242
    %v275 = vmul.f32 %v243, %v243
    %v276 = vmul.f32 %v244, %v244
    %v277 = vmul.f32 %v245, %v245
    %v278 = vmul.f32 %v246, %v246
    %v279 = vmul.f32 %v247, %v247
    %v280 = vmul.f32 %v248, %v248
    %v281 = vmul.f32 %v249, %v249
    %v282 = vmul.f32 %v250, %v250
    %v283 = vmul.f32 %v251, %v251
    %v284 = vmul.f32 %v252, %v252
    %v285 = vmul.f32 %v253, %v253
    %v286 = vmul.f32 %v254, %v254
    %v287 = vmul.f32 %v255, %v255
    %v288 = vmul.f32 %v256, %v256
    %v289 = vmul.f32 %v257, %v257
    %v290 = vsub.f32 %v258, %v274
    %v291 = vsub.f32 %v259, %v275
    %v292 = vsub.f32 %v260, %v276
    %v293 = vsub.f32 %v261, %v277
    %v294 = vsub.f32 %v262, %v278
    %v295 = vsub.f32 %v263, %v279
    %v296 = vsub.f32 %v264, %v280
    %v297 = vsub.f32 %v265, %v281
    %v298 = vsub.f32 %v266, %v282
    %v299 = vsub.f32 %v267, %v283
    %v300 = vsub.f32 %v268, %v284
    %v301 = vsub.f32 %v269, %v285
    %v302 = vsub.f32 %v270, %v286
    %v303 = vsub.f32 %v271, %v287
    %v304 = vsub.f32 %v272, %v288
    %v305 = vsub.f32 %v273, %v289
    %v306 = vadd.f32 %v290, 1e-05
    %v307 = vadd.f32 %v291, 1e-05
    %v308 = vadd.f32 %v292, 1e-05
    %v309 = vadd.f32 %v293, 1e-05
    %v310 = vadd.f32 %v294, 1e-05
    %v311 = vadd.f32 %v295, 1e-05
    %v312 = vadd.f32 %v296, 1e-05
    %v313 = vadd.f32 %v297, 1e-05
    %v314 = vadd.f32 %v298, 1e-05
    %v315 = vadd.f32 %v299, 1e-05
    %v316 = vadd.f32 %v300, 1e-05
    %v317 = vadd.f32 %v301, 1e-05
    %v318 = vadd.f32 %v302, 1e-05
    %v319 = vadd.f32 %v303, 1e-05
    %v320 = vadd.f32 %v304, 1e-05
    %v321 = vadd.f32 %v305, 1e-05
    %v322 = vrsqrt.pop %v306
    %v323 = vmul.f32 %v322, %v306
    %v324 = vmul.f32 %v323, %v322
    %v325 = vmul.f32 0.5, %v324
    %v326 = vsub.f32 1.5, %v325
    %v327 = vmul.f32 %v322, %v326
    %vm328 = vweird.f32 %v306
    %vm329 = vweird.f32 %v322
    %vm330 = vmor %vm328, %vm329
    %v331 = vsel %vm330, %v322, %v327
    %v332 = vrsqrt.pop %v307
    %v333 = vmul.f32 %v332, %v307
    %v334 = vmul.f32 %v333, %v332
    %v335 = vmul.f32 0.5, %v334
    %v336 = vsub.f32 1.5, %v335
    %v337 = vmul.f32 %v332, %v336
    %vm338 = vweird.f32 %v307
    %vm339 = vweird.f32 %v332
    %vm340 = vmor %vm338, %vm339
    %v341 = vsel %vm340, %v332, %v337
    %v342 = vrsqrt.pop %v308
    %v343 = vmul.f32 %v342, %v308
    %v344 = vmul.f32 %v343, %v342
    %v345 = vmul.f32 0.5, %v344
    %v346 = vsub.f32 1.5, %v345
    %v347 = vmul.f32 %v342, %v346
    %vm348 = vweird.f32 %v308
    %vm349 = vweird.f32 %v342
    %vm350 = vmor %vm348, %vm349
    %v351 = vsel %vm350, %v342, %v347
    %v352 = vrsqrt.pop %v309
    %v353 = vmul.f32 %v352, %v309
    %v354 = vmul.f32 %v353, %v352
    %v355 = vmul.f32 0.5, %v354
    %v356 = vsub.f32 1.5, %v355
    %v357 = vmul.f32 %v352, %v356
    %vm358 = vweird.f32 %v309
    %vm359 = vweird.f32 %v352
    %vm360 = vmor %vm358, %vm359
    %v361 = vsel %vm360, %v352, %v357
    %v362 = vrsqrt.pop %v310
    %v363 = vmul.f32 %v362, %v310
    %v364 = vmul.f32 %v363, %v362
    %v365 = vmul.f32 0.5, %v364
    %v366 = vsub.f32 1.5, %v365
    %v367 = vmul.f32 %v362, %v366
    %vm368 = vweird.f32 %v310
    %vm369 = vweird.f32 %v362
    %vm370 = vmor %vm368, %vm369
    %v371 = vsel %vm370, %v362, %v367
    %v372 = vrsqrt.pop %v311
    %v373 = vmul.f32 %v372, %v311
    %v374 = vmul.f32 %v373, %v372
    %v375 = vmul.f32 0.5, %v374
    %v376 = vsub.f32 1.5, %v375
    %v377 = vmul.f32 %v372, %v376
    %vm378 = vweird.f32 %v311
    %vm379 = vweird.f32 %v372
    %vm380 = vmor %vm378, %vm379
    %v381 = vsel %vm380, %v372, %v377
    %v382 = vrsqrt.pop %v312
    %v383 = vmul.f32 %v382, %v312
    %v384 = vmul.f32 %v383, %v382
    %v385 = vmul.f32 0.5, %v384
    %v386 = vsub.f32 1.5, %v385
    %v387 = vmul.f32 %v382, %v386
    %vm388 = vweird.f32 %v312
    %vm389 = vweird.f32 %v382
    %vm390 = vmor %vm388, %vm389
    %v391 = vsel %vm390, %v382, %v387
    %v392 = vrsqrt.pop %v313
    %v393 = vmul.f32 %v392, %v313
    %v394 = vmul.f32 %v393, %v392
    %v395 = vmul.f32 0.5, %v394
    %v396 = vsub.f32 1.5, %v395
    %v397 = vmul.f32 %v392, %v396
    %vm398 = vweird.f32 %v313
    %vm399 = vweird.f32 %v392
    %vm400 = vmor %vm398, %vm399
    %v401 = vsel %vm400, %v392, %v397
    %v402 = vrsqrt.pop %v314
    %v403 = vmul.f32 %v402, %v314
    %v404 = vmul.f32 %v403, %v402
    %v405 = vmul.f32 0.5, %v404
    %v406 = vsub.f32 1.5, %v405
    %v407 = vmul.f32 %v402, %v406
    %vm408 = vweird.f32 %v314
    %vm409 = vweird.f32 %v402
    %vm410 = vmor %vm408, %vm409
    %v411 = vsel %vm410, %v402, %v407
    %v412 = vrsqrt.pop %v315
    %v413 = vmul.f32 %v412, %v315
    %v414 = vmul.f32 %v413, %v412
    %v415 = vmul.f32 0.5, %v414
    %v416 = vsub.f32 1.5, %v415
    %v417 = vmul.f32 %v412, %v416
    %vm418 = vweird.f32 %v315
    %vm419 = vweird.f32 %v412
    %vm420 = vmor %vm418, %vm419
    %v421 = vsel %vm420, %v412, %v417
    %v422 = vrsqrt.pop %v316
    %v423 = vmul.f32 %v422, %v316
    %v424 = vmul.f32 %v423, %v422
    %v425 = vmul.f32 0.5, %v424
    %v426 = vsub.f32 1.5, %v425
    %v427 = vmul.f32 %v422, %v426
    %vm428 = vweird.f32 %v316
    %vm429 = vweird.f32 %v422
    %vm430 = vmor %vm428, %vm429
    %v431 = vsel %vm430, %v422, %v427
    %v432 = vrsqrt.pop %v317
    %v433 = vmul.f32 %v432, %v317
    %v434 = vmul.f32 %v433, %v432
    %v435 = vmul.f32 0.5, %v434
    %v436 = vsub.f32 1.5, %v435
    %v437 = vmul.f32 %v432, %v436
    %vm438 = vweird.f32 %v317
    %vm439 = vweird.f32 %v432
    %vm440 = vmor %vm438, %vm439
    %v441 = vsel %vm440, %v432, %v437
    %v442 = vrsqrt.pop %v318
    %v443 = vmul.f32 %v442, %v318
    %v444 = vmul.f32 %v443, %v442
    %v445 = vmul.f32 0.5, %v444
    %v446 = vsub.f32 1.5, %v445
    %v447 = vmul.f32 %v442, %v446
    %vm448 = vweird.f32 %v318
    %vm449 = vweird.f32 %v442
    %vm450 = vmor %vm448, %vm449
    %v451 = vsel %vm450, %v442, %v447
    %v452 = vrsqrt.pop %v319
    %v453 = vmul.f32 %v452, %v319
    %v454 = vmul.f32 %v453, %v452
    %v455 = vmul.f32 0.5, %v454
    %v456 = vsub.f32 1.5, %v455
    %v457 = vmul.f32 %v452, %v456
    %vm458 = vweird.f32 %v319
    %vm459 = vweird.f32 %v452
    %vm460 = vmor %vm458, %vm459
    %v461 = vsel %vm460, %v452, %v457
    %v462 = vrsqrt.pop %v320
    %v463 = vmul.f32 %v462, %v320
    %v464 = vmul.f32 %v463, %v462
    %v465 = vmul.f32 0.5, %v464
    %v466 = vsub.f32 1.5, %v465
    %v467 = vmul.f32 %v462, %v466
    %vm468 = vweird.f32 %v320
    %vm469 = vweird.f32 %v462
    %vm470 = vmor %vm468, %vm469
    %v471 = vsel %vm470, %v462, %v467
    %v472 = vrsqrt.pop %v321
    %v473 = vmul.f32 %v472, %v321
    %v474 = vmul.f32 %v473, %v472
    %v475 = vmul.f32 0.5, %v474
    %v476 = vsub.f32 1.5, %v475
    %v477 = vmul.f32 %v472, %v476
    %vm478 = vweird.f32 %v321
    %vm479 = vweird.f32 %v472
    %vm480 = vmor %vm478, %vm479
    %v481 = vsel %vm480, %v472, %v477
    %v482 = vsub.f32 %v18, %v242
    %v483 = vsub.f32 %v20, %v243
    %v484 = vsub.f32 %v22, %v244
    %v485 = vsub.f32 %v24, %v245
    %v486 = vsub.f32 %v26, %v246
    %v487 = vsub.f32 %v28, %v247
    %v488 = vsub.f32 %v30, %v248
    %v489 = vsub.f32 %v32, %v249
    %v490 = vsub.f32 %v34, %v250
    %v491 = vsub.f32 %v36, %v251
    %v492 = vsub.f32 %v38, %v252
    %v493 = vsub.f32 %v40, %v253
    %v494 = vsub.f32 %v42, %v254
    %v495 = vsub.f32 %v44, %v255
    %v496 = vsub.f32 %v46, %v256
    %v497 = vsub.f32 %v48, %v257
    %v498 = vmul.f32 %v482, %v331
    %v499 = vmul.f32 %v483, %v341
    %v500 = vmul.f32 %v484, %v351
    %v501 = vmul.f32 %v485, %v361
    %v502 = vmul.f32 %v486, %v371
    %v503 = vmul.f32 %v487, %v381
    %v504 = vmul.f32 %v488, %v391
    %v505 = vmul.f32 %v489, %v401
    %v506 = vmul.f32 %v490, %v411
    %v507 = vmul.f32 %v491, %v421
    %v508 = vmul.f32 %v492, %v431
    %v509 = vmul.f32 %v493, %v441
    %v510 = vmul.f32 %v494, %v451
    %v511 = vmul.f32 %v495, %v461
    %v512 = vmul.f32 %v496, %v471
    %v513 = vmul.f32 %v497, %v481
    %v514 = vpack.c.bf16 %v499, %v498
    %v515 = vpack.c.bf16 %v501, %v500
    %v516 = vpack.c.bf16 %v503, %v502
    %v517 = vpack.c.bf16 %v505, %v504
    %v518 = vpack.c.bf16 %v507, %v506
    %v519 = vpack.c.bf16 %v509, %v508
    %v520 = vpack.c.bf16 %v511, %v510
    %v521 = vpack.c.bf16 %v513, %v512
    %v522 = vsub.f32 %v19, %v242
    %v523 = vsub.f32 %v21, %v243
    %v524 = vsub.f32 %v23, %v244
    %v525 = vsub.f32 %v25, %v245
    %v526 = vsub.f32 %v27, %v246
    %v527 = vsub.f32 %v29, %v247
    %v528 = vsub.f32 %v31, %v248
    %v529 = vsub.f32 %v33, %v249
    %v530 = vsub.f32 %v35, %v250
    %v531 = vsub.f32 %v37, %v251
    %v532 = vsub.f32 %v39, %v252
    %v533 = vsub.f32 %v41, %v253
    %v534 = vsub.f32 %v43, %v254
    %v535 = vsub.f32 %v45, %v255
    %v536 = vsub.f32 %v47, %v256
    %v537 = vsub.f32 %v49, %v257
    %v538 = vmul.f32 %v522, %v331
    %v539 = vmul.f32 %v523, %v341
    %v540 = vmul.f32 %v524, %v351
    %v541 = vmul.f32 %v525, %v361
    %v542 = vmul.f32 %v526, %v371
    %v543 = vmul.f32 %v527, %v381
    %v544 = vmul.f32 %v528, %v391
    %v545 = vmul.f32 %v529, %v401
    %v546 = vmul.f32 %v530, %v411
    %v547 = vmul.f32 %v531, %v421
    %v548 = vmul.f32 %v532, %v431
    %v549 = vmul.f32 %v533, %v441
    %v550 = vmul.f32 %v534, %v451
    %v551 = vmul.f32 %v535, %v461
    %v552 = vmul.f32 %v536, %v471
    %v553 = vmul.f32 %v537, %v481
    %v554 = vpack.c.bf16 %v539, %v538
    %v555 = vpack.c.bf16 %v541, %v540
    %v556 = vpack.c.bf16 %v543, %v542
    %v557 = vpack.c.bf16 %v545, %v544
    %v558 = vpack.c.bf16 %v547, %v546
    %v559 = vpack.c.bf16 %v549, %v548
    %v560 = vpack.c.bf16 %v551, %v550
    %v561 = vpack.c.bf16 %v553, %v552
    %v562 = vld [vmem:[%s1] sm:$0xf]
    %v563 = vld [vmem:[%s1 + $0x4] sm:$0xf]
    %v564 = vld [vmem:[%s1 + $0x8] sm:$0xf]
    %v565 = vld [vmem:[%s1 + $0xc] sm:$0xf]
    %v566 = vld [vmem:[%s1 + $0x10] sm:$0xf]
    %v567 = vld [vmem:[%s1 + $0x14] sm:$0xf]
    %v568 = vld [vmem:[%s1 + $0x18] sm:$0xf]
    %v569 = vld [vmem:[%s1 + $0x1c] sm:$0xf]
    %v570 = vld [vmem:[%s1 + $0x20] sm:$0xf]
    %v571 = vld [vmem:[%s1 + $0x24] sm:$0xf]
    %v572 = vld [vmem:[%s1 + $0x28] sm:$0xf]
    %v573 = vld [vmem:[%s1 + $0x2c] sm:$0xf]
    %v574 = vld [vmem:[%s1 + $0x30] sm:$0xf]
    %v575 = vld [vmem:[%s1 + $0x34] sm:$0xf]
    %v576 = vld [vmem:[%s1 + $0x38] sm:$0xf]
    %v577 = vld [vmem:[%s1 + $0x3c] sm:$0xf]
    %v578 = vld [vmem:[%s2] sm:$0xf]
    %v579 = vld [vmem:[%s2 + $0x4] sm:$0xf]
    %v580 = vld [vmem:[%s2 + $0x8] sm:$0xf]
    %v581 = vld [vmem:[%s2 + $0xc] sm:$0xf]
    %v582 = vld [vmem:[%s2 + $0x10] sm:$0xf]
    %v583 = vld [vmem:[%s2 + $0x14] sm:$0xf]
    %v584 = vld [vmem:[%s2 + $0x18] sm:$0xf]
    %v585 = vld [vmem:[%s2 + $0x1c] sm:$0xf]
    %v586 = vld [vmem:[%s2 + $0x20] sm:$0xf]
    %v587 = vld [vmem:[%s2 + $0x24] sm:$0xf]
    %v588 = vld [vmem:[%s2 + $0x28] sm:$0xf]
    %v589 = vld [vmem:[%s2 + $0x2c] sm:$0xf]
    %v590 = vld [vmem:[%s2 + $0x30] sm:$0xf]
    %v591 = vld [vmem:[%s2 + $0x34] sm:$0xf]
    %v592 = vld [vmem:[%s2 + $0x38] sm:$0xf]
    %v593 = vld [vmem:[%s2 + $0x3c] sm:$0xf]
    %v610 = vunpack.c.l.b16 %v578
    %v611 = vunpack.c.l.b16 %v579
    %v612 = vunpack.c.l.b16 %v580
    %v613 = vunpack.c.l.b16 %v581
    %v614 = vunpack.c.l.b16 %v582
    %v615 = vunpack.c.l.b16 %v583
    %v616 = vunpack.c.l.b16 %v584
    %v617 = vunpack.c.l.b16 %v585
    %v618 = vunpack.c.l.b16 %v586
    %v619 = vunpack.c.l.b16 %v587
    %v620 = vunpack.c.l.b16 %v588
    %v621 = vunpack.c.l.b16 %v589
    %v622 = vunpack.c.l.b16 %v590
    %v623 = vunpack.c.l.b16 %v591
    %v624 = vunpack.c.l.b16 %v592
    %v625 = vunpack.c.l.b16 %v593
    %v626 = vpack.c.b16 %v611, %v610
    %v627 = vpack.c.b16 %v613, %v612
    %v628 = vpack.c.b16 %v615, %v614
    %v629 = vpack.c.b16 %v617, %v616
    %v630 = vpack.c.b16 %v619, %v618
    %v631 = vpack.c.b16 %v621, %v620
    %v632 = vpack.c.b16 %v623, %v622
    %v633 = vpack.c.b16 %v625, %v624
    %642 = vmatpush.bf16.msra.mxu0 %v633
    %643 = vmatpush.bf16.msra.mxu0 %v632
    %644 = vmatpush.bf16.msra.mxu0 %v631
    %645 = vmatpush.bf16.msra.mxu0 %v630
    %646 = vmatpush.bf16.msra.mxu0 %v629
    %647 = vmatpush.bf16.msra.mxu0 %v628
    %648 = vmatpush.bf16.msra.mxu0 %v627
    %649 = vmatpush.bf16.msra.mxu0 %v626
    %650 = vmatmul.bf16.gmra.mxu0 %v554
    %v651 = vpop.f32.mrf.mxu0
    %v652 = vadd.f32 0.0, %v651
    %v653 = vpop.f32.mrf.mxu0
    %v654 = vadd.f32 0.0, %v653
    %655 = vmatmul.bf16.gmra.mxu0 %v555
    %v656 = vpop.f32.mrf.mxu0
    %v657 = vadd.f32 0.0, %v656
    %v658 = vpop.f32.mrf.mxu0
    %v659 = vadd.f32 0.0, %v658
    %660 = vmatmul.bf16.gmra.mxu0 %v556
    %v661 = vpop.f32.mrf.mxu0
    %v662 = vadd.f32 0.0, %v661
    %v663 = vpop.f32.mrf.mxu0
    %v664 = vadd.f32 0.0, %v663
    %665 = vmatmul.bf16.gmra.mxu0 %v557
    %v666 = vpop.f32.mrf.mxu0
    %v667 = vadd.f32 0.0, %v666
    %v668 = vpop.f32.mrf.mxu0
    %v669 = vadd.f32 0.0, %v668
    %670 = vmatmul.bf16.gmra.mxu0 %v558
    %v671 = vpop.f32.mrf.mxu0
    %v672 = vadd.f32 0.0, %v671
    %v673 = vpop.f32.mrf.mxu0
    %v674 = vadd.f32 0.0, %v673
    %675 = vmatmul.bf16.gmra.mxu0 %v559
    %v676 = vpop.f32.mrf.mxu0
    %v677 = vadd.f32 0.0, %v676
    %v678 = vpop.f32.mrf.mxu0
    %v679 = vadd.f32 0.0, %v678
    %680 = vmatmul.bf16.gmra.mxu0 %v560
    %v681 = vpop.f32.mrf.mxu0
    %v682 = vadd.f32 0.0, %v681
    %v683 = vpop.f32.mrf.mxu0
    %v684 = vadd.f32 0.0, %v683
    %685 = vmatmul.bf16.gmra.mxu0 %v561
    %v686 = vpop.f32.mrf.mxu0
    %v687 = vadd.f32 0.0, %v686
    %v688 = vpop.f32.mrf.mxu0
    %v689 = vadd.f32 0.0, %v688
    %690 = vdwg.mxu0
    %v707 = vunpack.c.l.b16 %v562
    %v708 = vunpack.c.l.b16 %v563
    %v709 = vunpack.c.l.b16 %v564
    %v710 = vunpack.c.l.b16 %v565
    %v711 = vunpack.c.l.b16 %v566
    %v712 = vunpack.c.l.b16 %v567
    %v713 = vunpack.c.l.b16 %v568
    %v714 = vunpack.c.l.b16 %v569
    %v715 = vunpack.c.l.b16 %v570
    %v716 = vunpack.c.l.b16 %v571
    %v717 = vunpack.c.l.b16 %v572
    %v718 = vunpack.c.l.b16 %v573
    %v719 = vunpack.c.l.b16 %v574
    %v720 = vunpack.c.l.b16 %v575
    %v721 = vunpack.c.l.b16 %v576
    %v722 = vunpack.c.l.b16 %v577
    %v723 = vpack.c.b16 %v708, %v707
    %v724 = vpack.c.b16 %v710, %v709
    %v725 = vpack.c.b16 %v712, %v711
    %v726 = vpack.c.b16 %v714, %v713
    %v727 = vpack.c.b16 %v716, %v715
    %v728 = vpack.c.b16 %v718, %v717
    %v729 = vpack.c.b16 %v720, %v719
    %v730 = vpack.c.b16 %v722, %v721
    %739 = vmatpush.bf16.msra.mxu0 %v730
    %740 = vmatpush.bf16.msra.mxu0 %v729
    %741 = vmatpush.bf16.msra.mxu0 %v728
    %742 = vmatpush.bf16.msra.mxu0 %v727
    %743 = vmatpush.bf16.msra.mxu0 %v726
    %744 = vmatpush.bf16.msra.mxu0 %v725
    %745 = vmatpush.bf16.msra.mxu0 %v724
    %746 = vmatpush.bf16.msra.mxu0 %v723
    %747 = vmatmul.bf16.gmra.mxu0 %v514
    %v748 = vpop.f32.mrf.mxu0
    %v749 = vadd.f32 %v652, %v748
    %v750 = vpop.f32.mrf.mxu0
    %v751 = vadd.f32 %v654, %v750
    %752 = vmatmul.bf16.gmra.mxu0 %v515
    %v753 = vpop.f32.mrf.mxu0
    %v754 = vadd.f32 %v657, %v753
    %v755 = vpop.f32.mrf.mxu0
    %v756 = vadd.f32 %v659, %v755
    %757 = vmatmul.bf16.gmra.mxu0 %v516
    %v758 = vpop.f32.mrf.mxu0
    %v759 = vadd.f32 %v662, %v758
    %v760 = vpop.f32.mrf.mxu0
    %v761 = vadd.f32 %v664, %v760
    %762 = vmatmul.bf16.gmra.mxu0 %v517
    %v763 = vpop.f32.mrf.mxu0
    %v764 = vadd.f32 %v667, %v763
    %v765 = vpop.f32.mrf.mxu0
    %v766 = vadd.f32 %v669, %v765
    %767 = vmatmul.bf16.gmra.mxu0 %v518
    %v768 = vpop.f32.mrf.mxu0
    %v769 = vadd.f32 %v672, %v768
    %v770 = vpop.f32.mrf.mxu0
    %v771 = vadd.f32 %v674, %v770
    %772 = vmatmul.bf16.gmra.mxu0 %v519
    %v773 = vpop.f32.mrf.mxu0
    %v774 = vadd.f32 %v677, %v773
    %v775 = vpop.f32.mrf.mxu0
    %v776 = vadd.f32 %v679, %v775
    %777 = vmatmul.bf16.gmra.mxu0 %v520
    %v778 = vpop.f32.mrf.mxu0
    %v779 = vadd.f32 %v682, %v778
    %v780 = vpop.f32.mrf.mxu0
    %v781 = vadd.f32 %v684, %v780
    %782 = vmatmul.bf16.gmra.mxu0 %v521
    %v783 = vpop.f32.mrf.mxu0
    %v784 = vadd.f32 %v687, %v783
    %v785 = vpop.f32.mrf.mxu0
    %v786 = vadd.f32 %v689, %v785
    %787 = vdwg.mxu0
    %v788 = vld [vmem:[%s3] sm:$0x1]
    %v790 = vperm.slane %v788, 0
    %v792 = vadd.f32 %v749, %v790
    %v793 = vadd.f32 %v751, %v790
    %v794 = vadd.f32 %v754, %v790
    %v795 = vadd.f32 %v756, %v790
    %v796 = vadd.f32 %v759, %v790
    %v797 = vadd.f32 %v761, %v790
    %v798 = vadd.f32 %v764, %v790
    %v799 = vadd.f32 %v766, %v790
    %v800 = vadd.f32 %v769, %v790
    %v801 = vadd.f32 %v771, %v790
    %v802 = vadd.f32 %v774, %v790
    %v803 = vadd.f32 %v776, %v790
    %v804 = vadd.f32 %v779, %v790
    %v805 = vadd.f32 %v781, %v790
    %v806 = vadd.f32 %v784, %v790
    %v807 = vadd.f32 %v786, %v790
    %808 = vst [vmem:[#allocation2] sm:$0xff] %v792
    %809 = vst [vmem:[#allocation2 + $0x8] sm:$0xff] %v793
    %810 = vst [vmem:[#allocation2 + $0x10] sm:$0xff] %v794
    %811 = vst [vmem:[#allocation2 + $0x18] sm:$0xff] %v795
    %812 = vst [vmem:[#allocation2 + $0x20] sm:$0xff] %v796
    %813 = vst [vmem:[#allocation2 + $0x28] sm:$0xff] %v797
    %814 = vst [vmem:[#allocation2 + $0x30] sm:$0xff] %v798
    %815 = vst [vmem:[#allocation2 + $0x38] sm:$0xff] %v799
    %816 = vst [vmem:[#allocation2 + $0x40] sm:$0xff] %v800
    %817 = vst [vmem:[#allocation2 + $0x48] sm:$0xff] %v801
    %818 = vst [vmem:[#allocation2 + $0x50] sm:$0xff] %v802
    %819 = vst [vmem:[#allocation2 + $0x58] sm:$0xff] %v803
    %820 = vst [vmem:[#allocation2 + $0x60] sm:$0xff] %v804
    %821 = vst [vmem:[#allocation2 + $0x68] sm:$0xff] %v805
    %822 = vst [vmem:[#allocation2 + $0x70] sm:$0xff] %v806
    %823 = vst [vmem:[#allocation2 + $0x78] sm:$0xff] %v807
    // Predicated region
    $region18: #{_lambda_.1} parent=1 // pred_check
      _
    $region19: #{_lambda_.1} parent=1 // pred_check_branch
      %825 = sbr.rel (0) target = $region21
    $region20: #{_lambda_.1} parent=1 // pred_region
      %827 = vsyncadd [#allocation3], 0
      %s828 = sshll.u32 [#allocation2], 4
      %s829 = int_to_ptr.vmem [resolvable:$true] %s828
      %s830 = sshll.u32 %s4, 4
      %s831 = int_to_ptr.hbm [resolvable:$true] %s830
      %836 = dma.vmem_to_hbm [thread:$0]  %s829, 2048, %s831, [#allocation3], 128, 128, 8
    $region21: #{_lambda_.1} parent=1 // pred_fallthru
      _
    // Predicated region
    $region22: #{_lambda_.1} parent=1 // pred_check
      _
    $region23: #{_lambda_.1} parent=1 // pred_check_branch
      %838 = sbr.rel (0) target = $region25
    $region24: #{_lambda_.1} parent=1 // pred_region
      %840 = dma.done [#allocation3], 2048
    $region25: #{_lambda_.1} parent=1 // pred_fallthru
      _
    %841 = vsyncpa [#allocation3], 1

</llo_original>
